<compile_context>
chip_gen: v5e
topology: v5e:2x2
jax: 0.10.0
libtpu: 0.0.40
codegen_flags: <defaults>
</compile_context>

<pallas_src>
import jax
import jax.numpy as jnp
from jax.experimental import pallas as pl
from jax.experimental.pallas import tpu as pltpu

EPS = 1e-5


def _round_up(x, m):
    return (x + m - 1) // m * m


# ---------------------------------------------------------------------------
# Kernel: fused conv1 -> bn1 -> relu -> conv2 -> bn2 -> +residual -> relu
# for a block of NB batch samples (grid axis = batch blocks, "parallel").
# ---------------------------------------------------------------------------
def _resblock_kernel(x_ref, w1_ref, s1_ref, t1_ref, w2_ref, s2_ref, t2_ref,
                     out_ref):
    """Shapes (channels-last, channel-padded to Cp = multiple of 128):

    x_ref  : (NB, L, Cp)  input block (compute dtype, f32 or bf16)
    w*_ref : (3*Cp, Cp)   im2col conv weights, rows ordered [tap0|tap1|tap2]
    s*_ref : (1, Cp)      folded BN scale  = gamma / sqrt(var + eps)       (f32)
    t*_ref : (1, Cp)      folded BN shift  = beta + (bias - mean) * scale  (f32)
    out_ref: (NB, L, Cp)  f32 output block
    """
    NB, L, Cp = x_ref.shape

    x = x_ref[...]                                   # (NB, L, Cp)
    residual = x.astype(jnp.float32)                 # un-normalized input

    zrow = jnp.zeros((NB, 1, Cp), x.dtype)

    def im2col(v):
        # taps [l-1 | l | l+1] with zero halo at both sequence ends (per sample)
        left = jnp.concatenate([zrow, v[:, :L - 1, :]], axis=1)
        right = jnp.concatenate([v[:, 1:, :], zrow], axis=1)
        return jnp.concatenate([left, v, right], axis=2).reshape(NB * L, 3 * Cp)

    # ---- conv1 + bn1 + relu ------------------------------------------------
    h = jnp.dot(im2col(x), w1_ref[...], preferred_element_type=jnp.float32)
    h = jnp.maximum(h * s1_ref[...] + t1_ref[...], 0.0)     # bias+BN folded, f32
    h = h.astype(x.dtype).reshape(NB, L, Cp)                 # back to MXU dtype

    # ---- conv2 + bn2 + residual + relu --------------------------------------
    g = jnp.dot(im2col(h), w2_ref[...], preferred_element_type=jnp.float32)
    g = (g * s2_ref[...] + t2_ref[...]).reshape(NB, L, Cp)

    out_ref[...] = jnp.maximum(g + residual, 0.0).astype(out_ref.dtype)


# ---------------------------------------------------------------------------
# Wrapper: PyTorch NCL layout in/out, eval-mode BN + bias folding, channel
# padding to a lane-dense multiple of 128, batch padded to a multiple of NB.
# ---------------------------------------------------------------------------
def _fold_conv_bn(conv_w, conv_b, gamma, beta, mean, var, C, Cp, dtype):
    # conv_w: (C_out, C_in, 3) -> (3, Cp_in, Cp_out) -> (3*Cp, Cp)
    w = jnp.transpose(conv_w, (2, 1, 0)).astype(jnp.float32)     # (3, Cin, Cout)
    w_p = jnp.zeros((3, Cp, Cp), jnp.float32).at[:, :C, :C].set(w)
    w_mat = w_p.reshape(3 * Cp, Cp).astype(dtype)

    scale = gamma / jnp.sqrt(var + EPS)                          # (C,)
    shift = beta + (conv_b - mean) * scale                       # bias folded
    s_p = jnp.zeros((Cp,), jnp.float32).at[:C].set(scale).reshape(1, Cp)
    t_p = jnp.zeros((Cp,), jnp.float32).at[:C].set(shift).reshape(1, Cp)
    return w_mat, s_p, t_p


def residual_block_forward(x, params, *, compute_dtype=jnp.bfloat16,
                           batch_block=None):
    """x: (N, C, L) float32, PyTorch Conv1d layout. Returns (N, C, L) f32."""
    N, C, L = x.shape
    Cp = _round_up(C, 128)              # lane-dense channels
    itemsize = jnp.dtype(compute_dtype).itemsize

    # Per-sample VMEM footprint estimate: block buffers + in-kernel temporaries.
    per_sample = L * Cp * (2 * itemsize + 2 * 4 + 2 * 3 * itemsize + 3 * 4)
    if batch_block is None:
        batch_block = int(max(1, min(8, N, (16 << 20) // max(per_sample, 1))))
    NB = batch_block
    N_pad = _round_up(N, NB)

    # channels-last, compute dtype, pad channels to Cp and batch to N_pad.
    x_nlc = jnp.transpose(x, (0, 2, 1)).astype(compute_dtype)      # (N, L, C)
    x_p = jnp.pad(x_nlc, ((0, N_pad - N), (0, 0), (0, Cp - C)))    # (N_pad, L, Cp)

    w1, s1, t1 = _fold_conv_bn(params["conv1_w"], params["conv1_b"],
                               params["bn1_gamma"], params["bn1_beta"],
                               params["bn1_mean"], params["bn1_var"],
                               C, Cp, compute_dtype)
    w2, s2, t2 = _fold_conv_bn(params["conv2_w"], params["conv2_b"],
                               params["bn2_gamma"], params["bn2_beta"],
                               params["bn2_mean"], params["bn2_var"],
                               C, Cp, compute_dtype)

    # Advisory cost + VMEM budget.
    flops = 2 * 2 * N_pad * L * (3 * Cp) * Cp
    bytes_accessed = (N_pad * L * Cp * (itemsize + 4)      # x in + out
                      + 2 * 3 * Cp * Cp * itemsize         # weights
                      + 4 * Cp * 4)                        # scale/shift
    block_bytes = (NB * per_sample                          # x/out bufs + temps
                   + 2 * 2 * 3 * Cp * Cp * itemsize         # weights (2 convs)
                   + 4 * Cp * 4)
    vmem_limit = int(min(64 << 20, max(24 << 20, 2 * block_bytes)))

    vec_spec = pl.BlockSpec((1, Cp), lambda n: (0, 0))
    mat_spec = pl.BlockSpec((3 * Cp, Cp), lambda n: (0, 0))

    out_nlc = pl.pallas_call(
        _resblock_kernel,
        out_shape=jax.ShapeDtypeStruct((N_pad, L, Cp), jnp.float32),
        grid_spec=pltpu.PrefetchScalarGridSpec(
            num_scalar_prefetch=0,
            grid=(N_pad // NB,),
            in_specs=[
                pl.BlockSpec((NB, L, Cp), lambda n: (n, 0, 0)),   # x block
                mat_spec, vec_spec, vec_spec,                     # conv1/bn1
                mat_spec, vec_spec, vec_spec,                     # conv2/bn2
            ],
            out_specs=pl.BlockSpec((NB, L, Cp), lambda n: (n, 0, 0)),
        ),
        compiler_params=pltpu.CompilerParams(
            dimension_semantics=("parallel",),
            vmem_limit_bytes=vmem_limit),
        cost_estimate=pl.CostEstimate(flops=flops, transcendentals=0,
                                      bytes_accessed=bytes_accessed),
    )(x_p, w1, s1, t1, w2, s2, t2)

    # Back to PyTorch NCL layout, dropping padded batch/channels.
    # (Skip this transpose if the consumer can take channels-last.)
    return jnp.transpose(out_nlc[:N, :, :C], (0, 2, 1))


# ---------------------------------------------------------------------------
# Pure-JAX f32 reference (same eval-mode BN semantics) for correctness checks.
# ---------------------------------------------------------------------------
def _ref_forward(x, params):
    def conv(x_ncl, w, b):
        y = jax.lax.conv_general_dilated(
            x_ncl, w, window_strides=(1,), padding=((1, 1),),
            dimension_numbers=("NCH", "OIH", "NCH"))
        return y + b[None, :, None]

    def bn(y, gamma, beta, mean, var):
        return ((y - mean[None, :, None]) / jnp.sqrt(var[None, :, None] + EPS)
                * gamma[None, :, None] + beta[None, :, None])

    residual = x
    h = jax.nn.relu(bn(conv(x, params["conv1_w"], params["conv1_b"]),
                       params["bn1_gamma"], params["bn1_beta"],
                       params["bn1_mean"], params["bn1_var"]))
    h = bn(conv(h, params["conv2_w"], params["conv2_b"]),
           params["bn2_gamma"], params["bn2_beta"],
           params["bn2_mean"], params["bn2_var"])
    return jax.nn.relu(h + residual)


def _init_params(key, channels):
    ks = jax.random.split(key, 8)
    return {
        "conv1_w": 0.1 * jax.random.normal(ks[0], (channels, channels, 3), jnp.float32),
        "conv1_b": 0.1 * jax.random.normal(ks[1], (channels,), jnp.float32),
        "conv2_w": 0.1 * jax.random.normal(ks[2], (channels, channels, 3), jnp.float32),
        "conv2_b": 0.1 * jax.random.normal(ks[3], (channels,), jnp.float32),
        "bn1_gamma": 1.0 + 0.1 * jax.random.normal(ks[4], (channels,), jnp.float32),
        "bn1_beta": 0.1 * jax.random.normal(ks[5], (channels,), jnp.float32),
        "bn1_mean": 0.05 * jnp.arange(channels, dtype=jnp.float32),
        "bn1_var": 1.0 + 0.02 * jnp.arange(channels, dtype=jnp.float32),
        "bn2_gamma": 1.0 + 0.1 * jax.random.normal(ks[6], (channels,), jnp.float32),
        "bn2_beta": 0.1 * jax.random.normal(ks[7], (channels,), jnp.float32),
        "bn2_mean": -0.03 * jnp.arange(channels, dtype=jnp.float32),
        "bn2_var": 1.0 + 0.01 * jnp.arange(channels, dtype=jnp.float32),
    }


if __name__ == "__main__":
    key = jax.random.PRNGKey(0)
    k_x, k_x2, k_p = jax.random.split(key, 3)

    N, C, L = 2, 8, 16                      # (batch, channels, seq) — small test
    x = jax.random.normal(k_x, (N, C, L), jnp.float32)
    params = _init_params(k_p, C)

    ref = jax.block_until_ready(_ref_forward(x, params))

    # f32 MXU path: tight correctness check.
    out_f32 = jax.block_until_ready(
        residual_block_forward(x, params, compute_dtype=jnp.float32))
    assert out_f32.shape == (N, C, L)
    assert jnp.allclose(out_f32, ref, atol=1e-4, rtol=1e-4), "f32 path mismatch"

    # bf16 MXU path (default, perf config): loose check vs f32 reference.
    out_bf16 = jax.block_until_ready(
        residual_block_forward(x, params, compute_dtype=jnp.bfloat16))
    assert out_bf16.shape == (N, C, L)
    assert jnp.allclose(out_bf16, ref, atol=3e-2, rtol=3e-2), "bf16 path mismatch"

    # Ragged-batch path: N=3 with batch_block=2 exercises batch padding.
    x3 = jax.random.normal(k_x2, (3, C, L), jnp.float32)
    ref3 = _ref_forward(x3, params)
    out3 = jax.block_until_ready(
        residual_block_forward(x3, params, compute_dtype=jnp.float32,
                               batch_block=2))
    assert out3.shape == (3, C, L)
    assert jnp.allclose(out3, ref3, atol=1e-4, rtol=1e-4), "padded-batch mismatch"

    print("KERNEL_OK")
</pallas_src>

<mosaic_0001>
module attributes {stable_mosaic.version = 11 : i64} {
  func.func @_resblock_kernel(%arg0: i32, %arg1: memref<2x16x128xf32, #tpu.memory_space<vmem>>, %arg2: memref<384x128xf32, #tpu.memory_space<vmem>>, %arg3: memref<1x128xf32, #tpu.memory_space<vmem>>, %arg4: memref<1x128xf32, #tpu.memory_space<vmem>>, %arg5: memref<384x128xf32, #tpu.memory_space<vmem>>, %arg6: memref<1x128xf32, #tpu.memory_space<vmem>>, %arg7: memref<1x128xf32, #tpu.memory_space<vmem>>, %arg8: memref<2x16x128xf32, #tpu.memory_space<vmem>>) attributes {dimension_semantics = [#tpu.dimension_semantics<parallel>], iteration_bounds = array<i64: 1>, scalar_prefetch = 0 : i64, scratch_operands = 0 : i64, tpu.core_type = #tpu.core_type<tc>, window_params = [{transform_indices = @transform_0, window_bounds = array<i64: 2, 16, 128>}, {pipeline_mode = #tpu.pipeline_mode<synchronous>, transform_indices = @transform_1, window_bounds = array<i64: 384, 128>}, {pipeline_mode = #tpu.pipeline_mode<synchronous>, transform_indices = @transform_2, window_bounds = array<i64: 1, 128>}, {pipeline_mode = #tpu.pipeline_mode<synchronous>, transform_indices = @transform_3, window_bounds = array<i64: 1, 128>}, {pipeline_mode = #tpu.pipeline_mode<synchronous>, transform_indices = @transform_4, window_bounds = array<i64: 384, 128>}, {pipeline_mode = #tpu.pipeline_mode<synchronous>, transform_indices = @transform_5, window_bounds = array<i64: 1, 128>}, {pipeline_mode = #tpu.pipeline_mode<synchronous>, transform_indices = @transform_6, window_bounds = array<i64: 1, 128>}, {transform_indices = @transform_7, window_bounds = array<i64: 2, 16, 128>}]} {
    %c0 = arith.constant 0 : index
    %c0_0 = arith.constant 0 : index
    %c0_1 = arith.constant 0 : index
    %0 = vector.load %arg1[%c0, %c0_0, %c0_1] : memref<2x16x128xf32, #tpu.memory_space<vmem>>, vector<2x16x128xf32>
    %cst = arith.constant 0.000000e+00 : f32
    %1 = vector.broadcast %cst : f32 to vector<2x1x128xf32>
    %2 = vector.extract_strided_slice %0 {offsets = [0, 0, 0], sizes = [2, 15, 128], strides = [1, 1, 1]} : vector<2x16x128xf32> to vector<2x15x128xf32>
    %3 = tpu.concatenate %1, %2 in 1 : vector<2x1x128xf32>, vector<2x15x128xf32> -> vector<2x16x128xf32>
    %4 = vector.extract_strided_slice %0 {offsets = [0, 1, 0], sizes = [2, 15, 128], strides = [1, 1, 1]} : vector<2x16x128xf32> to vector<2x15x128xf32>
    %5 = tpu.concatenate %4, %1 in 1 : vector<2x15x128xf32>, vector<2x1x128xf32> -> vector<2x16x128xf32>
    %6 = tpu.concatenate %3, %0, %5 in 2 : vector<2x16x128xf32>, vector<2x16x128xf32>, vector<2x16x128xf32> -> vector<2x16x384xf32>
    %7 = vector.shape_cast %6 : vector<2x16x384xf32> to vector<32x384xf32>
    %c0_2 = arith.constant 0 : index
    %c0_3 = arith.constant 0 : index
    %8 = vector.load %arg2[%c0_2, %c0_3] : memref<384x128xf32, #tpu.memory_space<vmem>>, vector<384x128xf32>
    %cst_4 = arith.constant dense<0.000000e+00> : vector<32x128xf32>
    %9 = tpu.matmul %7, %8, %cst_4 {dimension_numbers = #tpu.dot_dimension_numbers<[1], [0], [0], [1], [0, 0, 1, 1], [], []>} : vector<32x384xf32>, vector<384x128xf32>, vector<32x128xf32> -> vector<32x128xf32>
    %c0_5 = arith.constant 0 : index
    %c0_6 = arith.constant 0 : index
    %10 = vector.load %arg3[%c0_5, %c0_6] : memref<1x128xf32, #tpu.memory_space<vmem>>, vector<1x128xf32>
    %11 = vector.broadcast %10 : vector<1x128xf32> to vector<32x128xf32>
    %12 = arith.mulf %9, %11 : vector<32x128xf32>
    %c0_7 = arith.constant 0 : index
    %c0_8 = arith.constant 0 : index
    %13 = vector.load %arg4[%c0_7, %c0_8] : memref<1x128xf32, #tpu.memory_space<vmem>>, vector<1x128xf32>
    %14 = vector.broadcast %13 : vector<1x128xf32> to vector<32x128xf32>
    %15 = arith.addf %12, %14 : vector<32x128xf32>
    %cst_9 = arith.constant 0.000000e+00 : f32
    %16 = vector.broadcast %cst_9 : f32 to vector<32x128xf32>
    %17 = arith.maximumf %15, %16 : vector<32x128xf32>
    %18 = vector.shape_cast %17 : vector<32x128xf32> to vector<2x16x128xf32>
    %19 = vector.extract_strided_slice %18 {offsets = [0, 0, 0], sizes = [2, 15, 128], strides = [1, 1, 1]} : vector<2x16x128xf32> to vector<2x15x128xf32>
    %20 = tpu.concatenate %1, %19 in 1 : vector<2x1x128xf32>, vector<2x15x128xf32> -> vector<2x16x128xf32>
    %21 = vector.extract_strided_slice %18 {offsets = [0, 1, 0], sizes = [2, 15, 128], strides = [1, 1, 1]} : vector<2x16x128xf32> to vector<2x15x128xf32>
    %22 = tpu.concatenate %21, %1 in 1 : vector<2x15x128xf32>, vector<2x1x128xf32> -> vector<2x16x128xf32>
    %23 = tpu.concatenate %20, %18, %22 in 2 : vector<2x16x128xf32>, vector<2x16x128xf32>, vector<2x16x128xf32> -> vector<2x16x384xf32>
    %24 = vector.shape_cast %23 : vector<2x16x384xf32> to vector<32x384xf32>
    %c0_10 = arith.constant 0 : index
    %c0_11 = arith.constant 0 : index
    %25 = vector.load %arg5[%c0_10, %c0_11] : memref<384x128xf32, #tpu.memory_space<vmem>>, vector<384x128xf32>
    %cst_12 = arith.constant dense<0.000000e+00> : vector<32x128xf32>
    %26 = tpu.matmul %24, %25, %cst_12 {dimension_numbers = #tpu.dot_dimension_numbers<[1], [0], [0], [1], [0, 0, 1, 1], [], []>} : vector<32x384xf32>, vector<384x128xf32>, vector<32x128xf32> -> vector<32x128xf32>
    %c0_13 = arith.constant 0 : index
    %c0_14 = arith.constant 0 : index
    %27 = vector.load %arg6[%c0_13, %c0_14] : memref<1x128xf32, #tpu.memory_space<vmem>>, vector<1x128xf32>
    %28 = vector.broadcast %27 : vector<1x128xf32> to vector<32x128xf32>
    %29 = arith.mulf %26, %28 : vector<32x128xf32>
    %c0_15 = arith.constant 0 : index
    %c0_16 = arith.constant 0 : index
    %30 = vector.load %arg7[%c0_15, %c0_16] : memref<1x128xf32, #tpu.memory_space<vmem>>, vector<1x128xf32>
    %31 = vector.broadcast %30 : vector<1x128xf32> to vector<32x128xf32>
    %32 = arith.addf %29, %31 : vector<32x128xf32>
    %33 = vector.shape_cast %32 : vector<32x128xf32> to vector<2x16x128xf32>
    %34 = arith.addf %33, %0 : vector<2x16x128xf32>
    %cst_17 = arith.constant 0.000000e+00 : f32
    %35 = vector.broadcast %cst_17 : f32 to vector<2x16x128xf32>
    %36 = arith.maximumf %34, %35 : vector<2x16x128xf32>
    %c0_18 = arith.constant 0 : index
    %c0_19 = arith.constant 0 : index
    %c0_20 = arith.constant 0 : index
    %37 = vector.load %arg8[%c0_18, %c0_19, %c0_20] : memref<2x16x128xf32, #tpu.memory_space<vmem>>, vector<2x16x128xf32>
    tpu.vector_store %arg8[%c0_18, %c0_19, %c0_20], %36 {strides = array<i32>} : memref<2x16x128xf32, #tpu.memory_space<vmem>>, vector<2x16x128xf32>,
    return
  }
  func.func @transform_0(%arg0: i32) -> (i32, i32, i32) {
    %c0_i32 = arith.constant 0 : i32
    %c0_i32_0 = arith.constant 0 : i32
    %c0_i32_1 = arith.constant 0 : i32
    return %arg0, %c0_i32, %c0_i32_0 : i32, i32, i32
  }
  func.func @transform_1(%arg0: i32) -> (i32, i32) {
    %c0_i32 = arith.constant 0 : i32
    %c0_i32_0 = arith.constant 0 : i32
    %c0_i32_1 = arith.constant 0 : i32
    return %c0_i32, %c0_i32_0 : i32, i32
  }
  func.func @transform_2(%arg0: i32) -> (i32, i32) {
    %c0_i32 = arith.constant 0 : i32
    %c0_i32_0 = arith.constant 0 : i32
    %c0_i32_1 = arith.constant 0 : i32
    return %c0_i32, %c0_i32_0 : i32, i32
  }
  func.func @transform_3(%arg0: i32) -> (i32, i32) {
    %c0_i32 = arith.constant 0 : i32
    %c0_i32_0 = arith.constant 0 : i32
    %c0_i32_1 = arith.constant 0 : i32
    return %c0_i32, %c0_i32_0 : i32, i32
  }
  func.func @transform_4(%arg0: i32) -> (i32, i32) {
    %c0_i32 = arith.constant 0 : i32
    %c0_i32_0 = arith.constant 0 : i32
    %c0_i32_1 = arith.constant 0 : i32
    return %c0_i32, %c0_i32_0 : i32, i32
  }
  func.func @transform_5(%arg0: i32) -> (i32, i32) {
    %c0_i32 = arith.constant 0 : i32
    %c0_i32_0 = arith.constant 0 : i32
    %c0_i32_1 = arith.constant 0 : i32
    return %c0_i32, %c0_i32_0 : i32, i32
  }
  func.func @transform_6(%arg0: i32) -> (i32, i32) {
    %c0_i32 = arith.constant 0 : i32
    %c0_i32_0 = arith.constant 0 : i32
    %c0_i32_1 = arith.constant 0 : i32
    return %c0_i32, %c0_i32_0 : i32, i32
  }
  func.func @transform_7(%arg0: i32) -> (i32, i32, i32) {
    %c0_i32 = arith.constant 0 : i32
    %c0_i32_0 = arith.constant 0 : i32
    %c0_i32_1 = arith.constant 0 : i32
    return %arg0, %c0_i32, %c0_i32_0 : i32, i32, i32
  }
}

</mosaic_0001>

<llo_original>
// kernel: tpu_custom_call.1
$region0: #{tpu_custom_call.1}
  #allocation0 [shape = 'u32[]', space=smem, size = 0x4, offset = 0x4, fixed_abs, tag = 'smem constant byte address 0x4 - core index']
  #allocation1 [shape = 'u32[72,128]{1,0:T(1,128)}', space=vmem, size = 0x9000, scoped, tag = 'internal scratch']
  %s0 = inlined_call_operand.hbm [shape: f32[2,16,128], index: 0, kind: input, shape index: {}]
  %s1 = inlined_call_operand.hbm [shape: f32[384,128], index: 1, kind: input, shape index: {}]
  %s2 = inlined_call_operand.vmem [shape: f32[1,128], index: 2, kind: input, shape index: {}]
  %s3 = inlined_call_operand.vmem [shape: f32[1,128], index: 3, kind: input, shape index: {}]
  %s4 = inlined_call_operand.hbm [shape: f32[384,128], index: 4, kind: input, shape index: {}]
  %s5 = inlined_call_operand.vmem [shape: f32[1,128], index: 5, kind: input, shape index: {}]
  %s6 = inlined_call_operand.vmem [shape: f32[1,128], index: 6, kind: input, shape index: {}]
  %s7 = inlined_call_operand.hbm [shape: f32[2,16,128], index: 7, kind: output, shape index: {}]
  %s8 = sld [smem:[#allocation0]]
  $region50: #{tpu_custom_call.1} parent=0
    _
  %s10 = ssub.s32 1, %s8
  %s11 = scalar_select 0, %s10, %s8
  $region1: #{tpu_custom_call.1} parent=0
    #allocation2 [shape = 'u8[16384]{0}', space=vmem, size = 0x4000, scoped, tag = 'input window, operand 0, single buffered']
    #allocation3 [shape = 's32[1]{0}', space=sflag, size = 0x4, scoped, tag = 'scoped memory for tpu_custom_call.1']
    #allocation4 [shape = 's32[1]{0}', space=sflag, size = 0x4, scoped, tag = 'scoped memory for tpu_custom_call.1']
    #allocation5 [shape = 'u8[196608]{0}', space=vmem, size = 0x30000, scoped, tag = 'input window, operand 1, single buffered']
    #allocation6 [shape = 's32[1]{0}', space=sflag, size = 0x4, scoped, tag = 'scoped memory for tpu_custom_call.1']
    #allocation7 [shape = 'u8[196608]{0}', space=vmem, size = 0x30000, scoped, tag = 'input window, operand 4, single buffered']
    #allocation8 [shape = 'u8[16384]{0}', space=vmem, size = 0x4000, scoped, tag = 'output window, operand 0, single buffered']
    %12 = vsyncpa [#allocation3], 0
    %13 = vsyncpa [#allocation6], 0
    %14 = vsyncpa [#allocation4], 0
    // Predicated region
    $region2: #{tpu_custom_call.1} parent=1 // pred_check
      _
    $region3: #{tpu_custom_call.1} parent=1 // pred_check_branch
      %16 = sbr.rel (0) target = $region5
    $region4: #{tpu_custom_call.1} parent=1 // pred_region
      %18 = vsyncadd [#allocation3], 0
      %s19 = sshll.u32 %s0, 4
      %s20 = int_to_ptr.hbm [resolvable:$true] %s19
      %s21 = sshll.u32 [#allocation2], 4
      %s22 = int_to_ptr.vmem [resolvable:$true] %s21
      %27 = dma.hbm_to_vmem [thread:$0]  %s20, 512, %s22, [#allocation3], 128, 128, 8
    $region5: #{tpu_custom_call.1} parent=1 // pred_fallthru
      _
    // Predicated region
    $region6: #{tpu_custom_call.1} parent=1 // pred_check
      _
    $region7: #{tpu_custom_call.1} parent=1 // pred_check_branch
      %29 = sbr.rel (0) target = $region9
    $region8: #{tpu_custom_call.1} parent=1 // pred_region
      %31 = vsyncadd [#allocation6], 0
      %s32 = sshll.u32 %s1, 4
      %s33 = int_to_ptr.hbm [resolvable:$true] %s32
      %s34 = sshll.u32 [#allocation5], 4
      %s35 = int_to_ptr.vmem [resolvable:$true] %s34
      %40 = dma.hbm_to_vmem [thread:$0]  %s33, 6144, %s35, [#allocation6], 128, 128, 8
    $region9: #{tpu_custom_call.1} parent=1 // pred_fallthru
      _
    // Predicated region
    $region10: #{tpu_custom_call.1} parent=1 // pred_check
      _
    $region11: #{tpu_custom_call.1} parent=1 // pred_check_branch
      %42 = sbr.rel (0) target = $region13
    $region12: #{tpu_custom_call.1} parent=1 // pred_region
      _
    $region13: #{tpu_custom_call.1} parent=1 // pred_fallthru
      _
    // Predicated region
    $region14: #{tpu_custom_call.1} parent=1 // pred_check
      _
    $region15: #{tpu_custom_call.1} parent=1 // pred_check_branch
      %44 = sbr.rel (0) target = $region17
    $region16: #{tpu_custom_call.1} parent=1 // pred_region
      _
    $region17: #{tpu_custom_call.1} parent=1 // pred_fallthru
      _
    // Predicated region
    $region18: #{tpu_custom_call.1} parent=1 // pred_check
      _
    $region19: #{tpu_custom_call.1} parent=1 // pred_check_branch
      %46 = sbr.rel (0) target = $region21
    $region20: #{tpu_custom_call.1} parent=1 // pred_region
      %48 = vsyncadd [#allocation6], 0
      %s49 = sshll.u32 %s4, 4
      %s50 = int_to_ptr.hbm [resolvable:$true] %s49
      %s51 = sshll.u32 [#allocation7], 4
      %s52 = int_to_ptr.vmem [resolvable:$true] %s51
      %57 = dma.hbm_to_vmem [thread:$0]  %s50, 6144, %s52, [#allocation6], 128, 128, 8
    $region21: #{tpu_custom_call.1} parent=1 // pred_fallthru
      _
    // Predicated region
    $region22: #{tpu_custom_call.1} parent=1 // pred_check
      _
    $region23: #{tpu_custom_call.1} parent=1 // pred_check_branch
      %59 = sbr.rel (0) target = $region25
    $region24: #{tpu_custom_call.1} parent=1 // pred_region
      _
    $region25: #{tpu_custom_call.1} parent=1 // pred_fallthru
      _
    // Predicated region
    $region26: #{tpu_custom_call.1} parent=1 // pred_check
      _
    $region27: #{tpu_custom_call.1} parent=1 // pred_check_branch
      %61 = sbr.rel (0) target = $region29
    $region28: #{tpu_custom_call.1} parent=1 // pred_region
      _
    $region29: #{tpu_custom_call.1} parent=1 // pred_fallthru
      _
    // Predicated region
    $region30: #{tpu_custom_call.1} parent=1 // pred_check
      _
    $region31: #{tpu_custom_call.1} parent=1 // pred_check_branch
      %63 = sbr.rel (0) target = $region33
    $region32: #{tpu_custom_call.1} parent=1 // pred_region
      %65 = dma.done [#allocation3], 512
    $region33: #{tpu_custom_call.1} parent=1 // pred_fallthru
      _
    // Predicated region
    $region34: #{tpu_custom_call.1} parent=1 // pred_check
      _
    $region35: #{tpu_custom_call.1} parent=1 // pred_check_branch
      %67 = sbr.rel (0) target = $region37
    $region36: #{tpu_custom_call.1} parent=1 // pred_region
      %69 = dma.done [#allocation6], 6144
    $region37: #{tpu_custom_call.1} parent=1 // pred_fallthru
      _
    // Predicated region
    $region38: #{tpu_custom_call.1} parent=1 // pred_check
      _
    $region39: #{tpu_custom_call.1} parent=1 // pred_check_branch
      %71 = sbr.rel (0) target = $region41
    $region40: #{tpu_custom_call.1} parent=1 // pred_region
      %73 = dma.done [#allocation6], 6144
    $region41: #{tpu_custom_call.1} parent=1 // pred_fallthru
      _
    %v74 = vld [vmem:[#allocation2] sm:$0xff]
    %v75 = vld [vmem:[#allocation2 + $0x8] sm:$0xff]
    %v76 = vld [vmem:[#allocation2 + $0x10] sm:$0xff]
    %v77 = vld [vmem:[#allocation2 + $0x18] sm:$0xff]
    %vm82 = vcmask 1040384
    %v83 = vrot.slane %v74, 7
    %v84 = vrot.slane %v75, 7
    %v85 = vsel %vm82, %v83, %v84
    %v86 = vrot.slane %v76, 7
    %v87 = vrot.slane %v77, 7
    %v88 = vsel %vm82, %v86, %v87
    %v93 = vsel %vm82, 0.0, %v83
    %v94 = vsel %vm82, 0.0, %v86
    %vm95 = vcmask 1046528
    %v96 = vrot.slane %v74, 1
    %v97 = vrot.slane %v75, 1
    %v98 = vsel %vm95, %v96, %v97
    %v99 = vrot.slane %v76, 1
    %v100 = vrot.slane %v77, 1
    %v101 = vsel %vm95, %v99, %v100
    %v106 = vsel %vm95, %v97, 0.0
    %v107 = vsel %vm95, %v100, 0.0
    %v108 = vld [vmem:[#allocation5] sm:$0xff]
    %v109 = vld [vmem:[#allocation5 + $0x8] sm:$0xff]
    %v110 = vld [vmem:[#allocation5 + $0x10] sm:$0xff]
    %v111 = vld [vmem:[#allocation5 + $0x18] sm:$0xff]
    %v112 = vld [vmem:[#allocation5 + $0x20] sm:$0xff]
    %v113 = vld [vmem:[#allocation5 + $0x28] sm:$0xff]
    %v114 = vld [vmem:[#allocation5 + $0x30] sm:$0xff]
    %v115 = vld [vmem:[#allocation5 + $0x38] sm:$0xff]
    %v116 = vld [vmem:[#allocation5 + $0x40] sm:$0xff]
    %v117 = vld [vmem:[#allocation5 + $0x48] sm:$0xff]
    %v118 = vld [vmem:[#allocation5 + $0x50] sm:$0xff]
    %v119 = vld [vmem:[#allocation5 + $0x58] sm:$0xff]
    %v120 = vld [vmem:[#allocation5 + $0x60] sm:$0xff]
    %v121 = vld [vmem:[#allocation5 + $0x68] sm:$0xff]
    %v122 = vld [vmem:[#allocation5 + $0x70] sm:$0xff]
    %v123 = vld [vmem:[#allocation5 + $0x78] sm:$0xff]
    %v124 = vld [vmem:[#allocation5 + $0x80] sm:$0xff]
    %v125 = vld [vmem:[#allocation5 + $0x88] sm:$0xff]
    %v126 = vld [vmem:[#allocation5 + $0x90] sm:$0xff]
    %v127 = vld [vmem:[#allocation5 + $0x98] sm:$0xff]
    %v128 = vld [vmem:[#allocation5 + $0xa0] sm:$0xff]
    %v129 = vld [vmem:[#allocation5 + $0xa8] sm:$0xff]
    %v130 = vld [vmem:[#allocation5 + $0xb0] sm:$0xff]
    %v131 = vld [vmem:[#allocation5 + $0xb8] sm:$0xff]
    %v132 = vld [vmem:[#allocation5 + $0xc0] sm:$0xff]
    %v133 = vld [vmem:[#allocation5 + $0xc8] sm:$0xff]
    %v134 = vld [vmem:[#allocation5 + $0xd0] sm:$0xff]
    %v135 = vld [vmem:[#allocation5 + $0xd8] sm:$0xff]
    %v136 = vld [vmem:[#allocation5 + $0xe0] sm:$0xff]
    %v137 = vld [vmem:[#allocation5 + $0xe8] sm:$0xff]
    %v138 = vld [vmem:[#allocation5 + $0xf0] sm:$0xff]
    %v139 = vld [vmem:[#allocation5 + $0xf8] sm:$0xff]
    %v140 = vld [vmem:[#allocation5 + $0x100] sm:$0xff]
    %v141 = vld [vmem:[#allocation5 + $0x108] sm:$0xff]
    %v142 = vld [vmem:[#allocation5 + $0x110] sm:$0xff]
    %v143 = vld [vmem:[#allocation5 + $0x118] sm:$0xff]
    %v144 = vld [vmem:[#allocation5 + $0x120] sm:$0xff]
    %v145 = vld [vmem:[#allocation5 + $0x128] sm:$0xff]
    %v146 = vld [vmem:[#allocation5 + $0x130] sm:$0xff]
    %v147 = vld [vmem:[#allocation5 + $0x138] sm:$0xff]
    %v148 = vld [vmem:[#allocation5 + $0x140] sm:$0xff]
    %v149 = vld [vmem:[#allocation5 + $0x148] sm:$0xff]
    %v150 = vld [vmem:[#allocation5 + $0x150] sm:$0xff]
    %v151 = vld [vmem:[#allocation5 + $0x158] sm:$0xff]
    %v152 = vld [vmem:[#allocation5 + $0x160] sm:$0xff]
    %v153 = vld [vmem:[#allocation5 + $0x168] sm:$0xff]
    %v154 = vld [vmem:[#allocation5 + $0x170] sm:$0xff]
    %v155 = vld [vmem:[#allocation5 + $0x178] sm:$0xff]
    %156 = vmatpush.msra.mxu0 %v123
    %157 = vmatpush.msra.mxu0 %v122
    %158 = vmatpush.msra.mxu0 %v121
    %159 = vmatpush.msra.mxu0 %v120
    %160 = vmatpush.msra.mxu0 %v119
    %161 = vmatpush.msra.mxu0 %v118
    %162 = vmatpush.msra.mxu0 %v117
    %163 = vmatpush.msra.mxu0 %v116
    %164 = vmatpush.msra.mxu0 %v115
    %165 = vmatpush.msra.mxu0 %v114
    %166 = vmatpush.msra.mxu0 %v113
    %167 = vmatpush.msra.mxu0 %v112
    %168 = vmatpush.msra.mxu0 %v111
    %169 = vmatpush.msra.mxu0 %v110
    %170 = vmatpush.msra.mxu0 %v109
    %171 = vmatpush.msra.mxu0 %v108
    %172 = vmatmul.f32.gmra.mxu0 %v93
    %v173 = vpop.f32.mrf.mxu0
    %v174 = vadd.f32 0.0, %v173
    %175 = vmatmul.f32.gmra.mxu0 %v85
    %v176 = vpop.f32.mrf.mxu0
    %v177 = vadd.f32 0.0, %v176
    %178 = vmatmul.f32.gmra.mxu0 %v94
    %v179 = vpop.f32.mrf.mxu0
    %v180 = vadd.f32 0.0, %v179
    %181 = vmatmul.f32.gmra.mxu0 %v88
    %v182 = vpop.f32.mrf.mxu0
    %v183 = vadd.f32 0.0, %v182
    %184 = vdwg.mxu0
    %185 = vmatpush.msra.mxu0 %v139
    %186 = vmatpush.msra.mxu0 %v138
    %187 = vmatpush.msra.mxu0 %v137
    %188 = vmatpush.msra.mxu0 %v136
    %189 = vmatpush.msra.mxu0 %v135
    %190 = vmatpush.msra.mxu0 %v134
    %191 = vmatpush.msra.mxu0 %v133
    %192 = vmatpush.msra.mxu0 %v132
    %193 = vmatpush.msra.mxu0 %v131
    %194 = vmatpush.msra.mxu0 %v130
    %195 = vmatpush.msra.mxu0 %v129
    %196 = vmatpush.msra.mxu0 %v128
    %197 = vmatpush.msra.mxu0 %v127
    %198 = vmatpush.msra.mxu0 %v126
    %199 = vmatpush.msra.mxu0 %v125
    %200 = vmatpush.msra.mxu0 %v124
    %201 = vmatmul.f32.gmra.mxu0 %v74
    %v202 = vpop.f32.mrf.mxu0
    %v203 = vadd.f32 %v174, %v202
    %204 = vmatmul.f32.gmra.mxu0 %v75
    %v205 = vpop.f32.mrf.mxu0
    %v206 = vadd.f32 %v177, %v205
    %207 = vmatmul.f32.gmra.mxu0 %v76
    %v208 = vpop.f32.mrf.mxu0
    %v209 = vadd.f32 %v180, %v208
    %210 = vmatmul.f32.gmra.mxu0 %v77
    %v211 = vpop.f32.mrf.mxu0
    %v212 = vadd.f32 %v183, %v211
    %213 = vdwg.mxu0
    %214 = vmatpush.msra.mxu0 %v155
    %215 = vmatpush.msra.mxu0 %v154
    %216 = vmatpush.msra.mxu0 %v153
    %217 = vmatpush.msra.mxu0 %v152
    %218 = vmatpush.msra.mxu0 %v151
    %219 = vmatpush.msra.mxu0 %v150
    %220 = vmatpush.msra.mxu0 %v149
    %221 = vmatpush.msra.mxu0 %v148
    %222 = vmatpush.msra.mxu0 %v147
    %223 = vmatpush.msra.mxu0 %v146
    %224 = vmatpush.msra.mxu0 %v145
    %225 = vmatpush.msra.mxu0 %v144
    %226 = vmatpush.msra.mxu0 %v143
    %227 = vmatpush.msra.mxu0 %v142
    %228 = vmatpush.msra.mxu0 %v141
    %229 = vmatpush.msra.mxu0 %v140
    %230 = vmatmul.f32.gmra.mxu0 %v98
    %v231 = vpop.f32.mrf.mxu0
    %v232 = vadd.f32 %v203, %v231
    %233 = vmatmul.f32.gmra.mxu0 %v106
    %v234 = vpop.f32.mrf.mxu0
    %v235 = vadd.f32 %v206, %v234
    %236 = vmatmul.f32.gmra.mxu0 %v101
    %v237 = vpop.f32.mrf.mxu0
    %v238 = vadd.f32 %v209, %v237
    %239 = vmatmul.f32.gmra.mxu0 %v107
    %v240 = vpop.f32.mrf.mxu0
    %v241 = vadd.f32 %v212, %v240
    %242 = vdwg.mxu0
    %v243 = vld [vmem:[%s2] sm:$0x1]
    %v245 = vperm.slane %v243, 0
    %v247 = vmul.f32 %v232, %v245
    %v248 = vmul.f32 %v235, %v245
    %v249 = vmul.f32 %v238, %v245
    %v250 = vmul.f32 %v241, %v245
    %v251 = vld [vmem:[%s3] sm:$0x1]
    %v253 = vperm.slane %v251, 0
    %v255 = vadd.f32 %v247, %v253
    %v256 = vadd.f32 %v248, %v253
    %v257 = vadd.f32 %v249, %v253
    %v258 = vadd.f32 %v250, %v253
    %v259 = vmax.f32 %v255, 0.0
    %v260 = vmax.f32 %v256, 0.0
    %v261 = vmax.f32 %v257, 0.0
    %v262 = vmax.f32 %v258, 0.0
    %v267 = vrot.slane %v259, 7
    %v268 = vrot.slane %v260, 7
    %v269 = vsel %vm82, %v267, %v268
    %v270 = vrot.slane %v261, 7
    %v271 = vrot.slane %v262, 7
    %v272 = vsel %vm82, %v270, %v271
    %v277 = vsel %vm82, 0.0, %v267
    %v278 = vsel %vm82, 0.0, %v270
    %v279 = vrot.slane %v259, 1
    %v280 = vrot.slane %v260, 1
    %v281 = vsel %vm95, %v279, %v280
    %v282 = vrot.slane %v261, 1
    %v283 = vrot.slane %v262, 1
    %v284 = vsel %vm95, %v282, %v283
    %v289 = vsel %vm95, %v280, 0.0
    %v290 = vsel %vm95, %v283, 0.0
    %v291 = vld [vmem:[#allocation7] sm:$0xff]
    %v292 = vld [vmem:[#allocation7 + $0x8] sm:$0xff]
    %v293 = vld [vmem:[#allocation7 + $0x10] sm:$0xff]
    %v294 = vld [vmem:[#allocation7 + $0x18] sm:$0xff]
    %v295 = vld [vmem:[#allocation7 + $0x20] sm:$0xff]
    %v296 = vld [vmem:[#allocation7 + $0x28] sm:$0xff]
    %v297 = vld [vmem:[#allocation7 + $0x30] sm:$0xff]
    %v298 = vld [vmem:[#allocation7 + $0x38] sm:$0xff]
    %v299 = vld [vmem:[#allocation7 + $0x40] sm:$0xff]
    %v300 = vld [vmem:[#allocation7 + $0x48] sm:$0xff]
    %v301 = vld [vmem:[#allocation7 + $0x50] sm:$0xff]
    %v302 = vld [vmem:[#allocation7 + $0x58] sm:$0xff]
    %v303 = vld [vmem:[#allocation7 + $0x60] sm:$0xff]
    %v304 = vld [vmem:[#allocation7 + $0x68] sm:$0xff]
    %v305 = vld [vmem:[#allocation7 + $0x70] sm:$0xff]
    %v306 = vld [vmem:[#allocation7 + $0x78] sm:$0xff]
    %v307 = vld [vmem:[#allocation7 + $0x80] sm:$0xff]
    %v308 = vld [vmem:[#allocation7 + $0x88] sm:$0xff]
    %v309 = vld [vmem:[#allocation7 + $0x90] sm:$0xff]
    %v310 = vld [vmem:[#allocation7 + $0x98] sm:$0xff]
    %v311 = vld [vmem:[#allocation7 + $0xa0] sm:$0xff]
    %v312 = vld [vmem:[#allocation7 + $0xa8] sm:$0xff]
    %v313 = vld [vmem:[#allocation7 + $0xb0] sm:$0xff]
    %v314 = vld [vmem:[#allocation7 + $0xb8] sm:$0xff]
    %v315 = vld [vmem:[#allocation7 + $0xc0] sm:$0xff]
    %v316 = vld [vmem:[#allocation7 + $0xc8] sm:$0xff]
    %v317 = vld [vmem:[#allocation7 + $0xd0] sm:$0xff]
    %v318 = vld [vmem:[#allocation7 + $0xd8] sm:$0xff]
    %v319 = vld [vmem:[#allocation7 + $0xe0] sm:$0xff]
    %v320 = vld [vmem:[#allocation7 + $0xe8] sm:$0xff]
    %v321 = vld [vmem:[#allocation7 + $0xf0] sm:$0xff]
    %v322 = vld [vmem:[#allocation7 + $0xf8] sm:$0xff]
    %v323 = vld [vmem:[#allocation7 + $0x100] sm:$0xff]
    %v324 = vld [vmem:[#allocation7 + $0x108] sm:$0xff]
    %v325 = vld [vmem:[#allocation7 + $0x110] sm:$0xff]
    %v326 = vld [vmem:[#allocation7 + $0x118] sm:$0xff]
    %v327 = vld [vmem:[#allocation7 + $0x120] sm:$0xff]
    %v328 = vld [vmem:[#allocation7 + $0x128] sm:$0xff]
    %v329 = vld [vmem:[#allocation7 + $0x130] sm:$0xff]
    %v330 = vld [vmem:[#allocation7 + $0x138] sm:$0xff]
    %v331 = vld [vmem:[#allocation7 + $0x140] sm:$0xff]
    %v332 = vld [vmem:[#allocation7 + $0x148] sm:$0xff]
    %v333 = vld [vmem:[#allocation7 + $0x150] sm:$0xff]
    %v334 = vld [vmem:[#allocation7 + $0x158] sm:$0xff]
    %v335 = vld [vmem:[#allocation7 + $0x160] sm:$0xff]
    %v336 = vld [vmem:[#allocation7 + $0x168] sm:$0xff]
    %v337 = vld [vmem:[#allocation7 + $0x170] sm:$0xff]
    %v338 = vld [vmem:[#allocation7 + $0x178] sm:$0xff]
    %339 = vmatpush.msra.mxu0 %v306
    %340 = vmatpush.msra.mxu0 %v305
    %341 = vmatpush.msra.mxu0 %v304
    %342 = vmatpush.msra.mxu0 %v303
    %343 = vmatpush.msra.mxu0 %v302
    %344 = vmatpush.msra.mxu0 %v301
    %345 = vmatpush.msra.mxu0 %v300
    %346 = vmatpush.msra.mxu0 %v299
    %347 = vmatpush.msra.mxu0 %v298
    %348 = vmatpush.msra.mxu0 %v297
    %349 = vmatpush.msra.mxu0 %v296
    %350 = vmatpush.msra.mxu0 %v295
    %351 = vmatpush.msra.mxu0 %v294
    %352 = vmatpush.msra.mxu0 %v293
    %353 = vmatpush.msra.mxu0 %v292
    %354 = vmatpush.msra.mxu0 %v291
    %355 = vmatmul.f32.gmra.mxu0 %v277
    %v356 = vpop.f32.mrf.mxu0
    %v357 = vadd.f32 0.0, %v356
    %358 = vmatmul.f32.gmra.mxu0 %v269
    %v359 = vpop.f32.mrf.mxu0
    %v360 = vadd.f32 0.0, %v359
    %361 = vmatmul.f32.gmra.mxu0 %v278
    %v362 = vpop.f32.mrf.mxu0
    %v363 = vadd.f32 0.0, %v362
    %364 = vmatmul.f32.gmra.mxu0 %v272
    %v365 = vpop.f32.mrf.mxu0
    %v366 = vadd.f32 0.0, %v365
    %367 = vdwg.mxu0
    %368 = vmatpush.msra.mxu0 %v322
    %369 = vmatpush.msra.mxu0 %v321
    %370 = vmatpush.msra.mxu0 %v320
    %371 = vmatpush.msra.mxu0 %v319
    %372 = vmatpush.msra.mxu0 %v318
    %373 = vmatpush.msra.mxu0 %v317
    %374 = vmatpush.msra.mxu0 %v316
    %375 = vmatpush.msra.mxu0 %v315
    %376 = vmatpush.msra.mxu0 %v314
    %377 = vmatpush.msra.mxu0 %v313
    %378 = vmatpush.msra.mxu0 %v312
    %379 = vmatpush.msra.mxu0 %v311
    %380 = vmatpush.msra.mxu0 %v310
    %381 = vmatpush.msra.mxu0 %v309
    %382 = vmatpush.msra.mxu0 %v308
    %383 = vmatpush.msra.mxu0 %v307
    %384 = vmatmul.f32.gmra.mxu0 %v259
    %v385 = vpop.f32.mrf.mxu0
    %v386 = vadd.f32 %v357, %v385
    %387 = vmatmul.f32.gmra.mxu0 %v260
    %v388 = vpop.f32.mrf.mxu0
    %v389 = vadd.f32 %v360, %v388
    %390 = vmatmul.f32.gmra.mxu0 %v261
    %v391 = vpop.f32.mrf.mxu0
    %v392 = vadd.f32 %v363, %v391
    %393 = vmatmul.f32.gmra.mxu0 %v262
    %v394 = vpop.f32.mrf.mxu0
    %v395 = vadd.f32 %v366, %v394
    %396 = vdwg.mxu0
    %397 = vmatpush.msra.mxu0 %v338
    %398 = vmatpush.msra.mxu0 %v337
    %399 = vmatpush.msra.mxu0 %v336
    %400 = vmatpush.msra.mxu0 %v335
    %401 = vmatpush.msra.mxu0 %v334
    %402 = vmatpush.msra.mxu0 %v333
    %403 = vmatpush.msra.mxu0 %v332
    %404 = vmatpush.msra.mxu0 %v331
    %405 = vmatpush.msra.mxu0 %v330
    %406 = vmatpush.msra.mxu0 %v329
    %407 = vmatpush.msra.mxu0 %v328
    %408 = vmatpush.msra.mxu0 %v327
    %409 = vmatpush.msra.mxu0 %v326
    %410 = vmatpush.msra.mxu0 %v325
    %411 = vmatpush.msra.mxu0 %v324
    %412 = vmatpush.msra.mxu0 %v323
    %413 = vmatmul.f32.gmra.mxu0 %v281
    %v414 = vpop.f32.mrf.mxu0
    %v415 = vadd.f32 %v386, %v414
    %416 = vmatmul.f32.gmra.mxu0 %v289
    %v417 = vpop.f32.mrf.mxu0
    %v418 = vadd.f32 %v389, %v417
    %419 = vmatmul.f32.gmra.mxu0 %v284
    %v420 = vpop.f32.mrf.mxu0
    %v421 = vadd.f32 %v392, %v420
    %422 = vmatmul.f32.gmra.mxu0 %v290
    %v423 = vpop.f32.mrf.mxu0
    %v424 = vadd.f32 %v395, %v423
    %425 = vdwg.mxu0
    %v426 = vld [vmem:[%s5] sm:$0x1]
    %v428 = vperm.slane %v426, 0
    %v430 = vmul.f32 %v415, %v428
    %v431 = vmul.f32 %v418, %v428
    %v432 = vmul.f32 %v421, %v428
    %v433 = vmul.f32 %v424, %v428
    %v434 = vld [vmem:[%s6] sm:$0x1]
    %v436 = vperm.slane %v434, 0
    %v438 = vadd.f32 %v430, %v436
    %v439 = vadd.f32 %v431, %v436
    %v440 = vadd.f32 %v432, %v436
    %v441 = vadd.f32 %v433, %v436
    %v442 = vadd.f32 %v438, %v74
    %v443 = vadd.f32 %v439, %v75
    %v444 = vadd.f32 %v440, %v76
    %v445 = vadd.f32 %v441, %v77
    %v446 = vmax.f32 %v442, 0.0
    %v447 = vmax.f32 %v443, 0.0
    %v448 = vmax.f32 %v444, 0.0
    %v449 = vmax.f32 %v445, 0.0
    %450 = vst [vmem:[#allocation8] sm:$0xff] %v446
    %451 = vst [vmem:[#allocation8 + $0x8] sm:$0xff] %v447
    %452 = vst [vmem:[#allocation8 + $0x10] sm:$0xff] %v448
    %453 = vst [vmem:[#allocation8 + $0x18] sm:$0xff] %v449
    // Predicated region
    $region42: #{tpu_custom_call.1} parent=1 // pred_check
      _
    $region43: #{tpu_custom_call.1} parent=1 // pred_check_branch
      %455 = sbr.rel (0) target = $region45
    $region44: #{tpu_custom_call.1} parent=1 // pred_region
      %457 = vsyncadd [#allocation4], 0
      %s458 = sshll.u32 [#allocation8], 4
      %s459 = int_to_ptr.vmem [resolvable:$true] %s458
      %s460 = sshll.u32 %s7, 4
      %s461 = int_to_ptr.hbm [resolvable:$true] %s460
      %466 = dma.vmem_to_hbm [thread:$0]  %s459, 512, %s461, [#allocation4], 128, 128, 8
    $region45: #{tpu_custom_call.1} parent=1 // pred_fallthru
      _
    // Predicated region
    $region46: #{tpu_custom_call.1} parent=1 // pred_check
      _
    $region47: #{tpu_custom_call.1} parent=1 // pred_check_branch
      %468 = sbr.rel (0) target = $region49
    $region48: #{tpu_custom_call.1} parent=1 // pred_region
      %470 = dma.done [#allocation4], 512
    $region49: #{tpu_custom_call.1} parent=1 // pred_fallthru
      _
    %471 = vsyncpa [#allocation3], 1
    %472 = vsyncpa [#allocation6], 1
    %473 = vsyncpa [#allocation4], 1

</llo_original>
